<compile_context>
chip_gen: v5e
topology: v5e:2x2
jax: 0.10.0
libtpu: 0.0.40
codegen_flags: <defaults>
</compile_context>

<pallas_src>
import jax
import jax.numpy as jnp
from jax.experimental import pallas as pl


# ---------------------------------------------------------------------------
# Single fused kernel: 3x (SAGE conv + ReLU + BatchNorm) + final Linear + ReLU.
# ---------------------------------------------------------------------------
def _gnn_fused_kernel(
    x_ref, adj_ref,
    w1r_ref, w1o_ref, b1_ref,
    w2r_ref, w2o_ref, b2_ref,
    w3r_ref, w3o_ref, b3_ref,
    wl_ref, bl_ref,
    o_ref,
):
    B, N, _ = adj_ref.shape
    H = w1r_ref.shape[1]

    # ---- degree (computed once, adj itself is never rescaled) --------------
    adj = adj_ref[...]                                           # [B, N, N]
    deg = jnp.sum(adj, axis=-1, keepdims=True)                   # [B, N, 1]
    inv_deg = pl.reciprocal(jnp.maximum(deg, 1.0), approx=False)  # exact, parity

    x0 = x_ref[...]                                              # [B*N, Cin]

    def sage_relu_bn(x2d, wr_ref, wo_ref, b_ref):
        c_in = x2d.shape[-1]
        # mean aggregation: single batched MXU contraction, then scale the
        # [B, N, C] result by 1/deg (adj_n never materialized).
        agg = jnp.einsum(
            'bnm,bmc->bnc', adj, x2d.reshape(B, N, c_in),
            preferred_element_type=jnp.float32)
        agg = (agg * inv_deg).reshape(B * N, c_in)
        # lin_rel(agg) + lin_root(x)   (weights pre-transposed to [Cin, Cout])
        h = jnp.dot(agg, wr_ref[...], preferred_element_type=jnp.float32)
        h = h + jnp.dot(x2d, wo_ref[...], preferred_element_type=jnp.float32)
        h = h + b_ref[...]
        h = jnp.maximum(h, 0.0)                                  # ReLU
        # BatchNorm1d, training mode: batch stats over B*N, biased variance,
        # gamma=1 / beta=0 (fresh-module defaults), eps=1e-5.  One pass:
        # var = E[h^2] - mean^2 (ReLU'd fp32 makes cancellation risk negligible).
        mean = jnp.mean(h, axis=0, keepdims=True)
        msq = jnp.mean(h * h, axis=0, keepdims=True)
        var = jnp.maximum(msq - mean * mean, 0.0)
        return (h - mean) * jax.lax.rsqrt(var + 1e-5)

    x1 = sage_relu_bn(x0, w1r_ref, w1o_ref, b1_ref)              # [B*N, H]
    x2 = sage_relu_bn(x1, w2r_ref, w2o_ref, b2_ref)              # [B*N, H]
    # Accumulate x1's final-Linear partial now so x1 dies before x3 is built
    # (at most two activation slabs live at any time).
    out = jnp.dot(x1, wl_ref[0:H, :], preferred_element_type=jnp.float32)
    x3 = sage_relu_bn(x2, w3r_ref, w3o_ref, b3_ref)              # [B*N, C3]
    out = out + jnp.dot(x2, wl_ref[H:2 * H, :],
                        preferred_element_type=jnp.float32)
    out = out + jnp.dot(x3, wl_ref[2 * H:, :],
                        preferred_element_type=jnp.float32)
    out = out + bl_ref[...]
    o_ref[...] = jnp.maximum(out, 0.0)                           # final ReLU
    # TODO(synk): for large B*N, emit the output as a lane-dense
    # [(B*N*Fout)//128, 128] slab (reshape on host) to avoid masked vst.msk
    # partial stores; negligible at this demo size.


def gnn_forward(x, adj, params):
    B, N, Cin = x.shape
    w1r, w1o, b1 = params["conv1"]
    w2r, w2o, b2 = params["conv2"]
    w3r, w3o, b3 = params["conv3"]
    wl, bl = params["lin"]
    Fout = wl.shape[1]

    out2d = pl.pallas_call(
        _gnn_fused_kernel,
        out_shape=jax.ShapeDtypeStruct((B * N, Fout), jnp.float32),
    )(
        x.reshape(B * N, Cin), adj,
        w1r, w1o, b1.reshape(1, -1),
        w2r, w2o, b2.reshape(1, -1),
        w3r, w3o, b3.reshape(1, -1),
        wl, bl.reshape(1, -1),
    )
    return out2d.reshape(B, N, Fout)


def init_params(key, in_channels, hidden_channels, out_channels):
    """Deterministic synthetic parameters. Weights stored as [Cin, Cout]."""
    ks = jax.random.split(key, 8)
    s = 0.1

    def lin_w(k, cin, cout):
        return (s * jax.random.normal(k, (cin, cout))).astype(jnp.float32)

    params = {
        "conv1": (lin_w(ks[0], in_channels, hidden_channels),
                  lin_w(ks[1], in_channels, hidden_channels),
                  jnp.zeros((hidden_channels,), jnp.float32)),
        "conv2": (lin_w(ks[2], hidden_channels, hidden_channels),
                  lin_w(ks[3], hidden_channels, hidden_channels),
                  jnp.zeros((hidden_channels,), jnp.float32)),
        "conv3": (lin_w(ks[4], hidden_channels, out_channels),
                  lin_w(ks[5], hidden_channels, out_channels),
                  jnp.zeros((out_channels,), jnp.float32)),
        "lin": (lin_w(ks[6], 2 * hidden_channels + out_channels, out_channels),
                (s * jax.random.normal(ks[7], (out_channels,))).astype(jnp.float32)),
    }
    return params


if __name__ == "__main__":
    B, N = 2, 16
    in_channels, hidden_channels, out_channels = 4, 32, 16

    key = jax.random.PRNGKey(0)
    kx, ka, kp = jax.random.split(key, 3)

    x = jax.random.normal(kx, (B, N, in_channels), dtype=jnp.float32)

    # symmetric 0/1 adjacency with self-loops
    u = jax.random.uniform(ka, (B, N, N))
    a = (u < 0.3)
    adj = (a | jnp.swapaxes(a, -1, -2) | jnp.eye(N, dtype=bool)[None]).astype(jnp.float32)

    params = init_params(kp, in_channels, hidden_channels, out_channels)

    out = gnn_forward(x, adj, params)
    out = jax.block_until_ready(out)
    assert out.shape == (B, N, out_channels)
    print("KERNEL_OK")
</pallas_src>

<mosaic_0001>
module attributes {stable_mosaic.version = 11 : i64} {
  func.func @_gnn_fused_kernel(%arg0: memref<32x4xf32, #tpu.memory_space<vmem>>, %arg1: memref<2x16x16xf32, #tpu.memory_space<vmem>>, %arg2: memref<4x32xf32, #tpu.memory_space<vmem>>, %arg3: memref<4x32xf32, #tpu.memory_space<vmem>>, %arg4: memref<1x32xf32, #tpu.memory_space<vmem>>, %arg5: memref<32x32xf32, #tpu.memory_space<vmem>>, %arg6: memref<32x32xf32, #tpu.memory_space<vmem>>, %arg7: memref<1x32xf32, #tpu.memory_space<vmem>>, %arg8: memref<32x16xf32, #tpu.memory_space<vmem>>, %arg9: memref<32x16xf32, #tpu.memory_space<vmem>>, %arg10: memref<1x16xf32, #tpu.memory_space<vmem>>, %arg11: memref<80x16xf32, #tpu.memory_space<vmem>>, %arg12: memref<1x16xf32, #tpu.memory_space<vmem>>, %arg13: memref<32x16xf32, #tpu.memory_space<vmem>>) attributes {dimension_semantics = [], scalar_prefetch = 0 : i64, scratch_operands = 0 : i64, tpu.core_type = #tpu.core_type<tc>} {
    %c0 = arith.constant 0 : index
    %c0_0 = arith.constant 0 : index
    %c0_1 = arith.constant 0 : index
    %0 = vector.load %arg1[%c0, %c0_0, %c0_1] : memref<2x16x16xf32, #tpu.memory_space<vmem>>, vector<2x16x16xf32>
    %cst = arith.constant dense<0.000000e+00> : vector<2x16xf32>
    %1 = vector.multi_reduction <add>, %0, %cst [2] : vector<2x16x16xf32> to vector<2x16xf32>
    %2 = vector.shape_cast %1 : vector<2x16xf32> to vector<2x16x1xf32>
    %cst_2 = arith.constant 1.000000e+00 : f32
    %3 = vector.broadcast %cst_2 : f32 to vector<2x16x1xf32>
    %4 = arith.maximumf %2, %3 : vector<2x16x1xf32>
    %5 = tpu.reciprocal %4 : vector<2x16x1xf32> -> vector<2x16x1xf32>
    %c0_3 = arith.constant 0 : index
    %c0_4 = arith.constant 0 : index
    %6 = vector.load %arg0[%c0_3, %c0_4] : memref<32x4xf32, #tpu.memory_space<vmem>>, vector<32x4xf32>
    %7 = vector.shape_cast %6 : vector<32x4xf32> to vector<2x16x4xf32>
    "tpu.trace_start"() <{level = 10 : i32, message = "bnm,bmc->bnc"}> : () -> ()
    %cst_5 = arith.constant dense<0.000000e+00> : vector<2x16x4xf32>
    %8 = tpu.matmul %0, %7, %cst_5 {dimension_numbers = #tpu.dot_dimension_numbers<[2], [1], [1], [2], [0, 0, 0, 1, 1, 2], [0], [0]>} : vector<2x16x16xf32>, vector<2x16x4xf32>, vector<2x16x4xf32> -> vector<2x16x4xf32>
    "tpu.trace_stop"() : () -> ()
    %9 = vector.broadcast %5 : vector<2x16x1xf32> to vector<2x16x4xf32>
    %10 = arith.mulf %8, %9 : vector<2x16x4xf32>
    %11 = vector.shape_cast %10 : vector<2x16x4xf32> to vector<32x4xf32>
    %c0_6 = arith.constant 0 : index
    %c0_7 = arith.constant 0 : index
    %12 = vector.load %arg2[%c0_6, %c0_7] : memref<4x32xf32, #tpu.memory_space<vmem>>, vector<4x32xf32>
    %cst_8 = arith.constant dense<0.000000e+00> : vector<32x32xf32>
    %13 = tpu.matmul %11, %12, %cst_8 {dimension_numbers = #tpu.dot_dimension_numbers<[1], [0], [0], [1], [0, 0, 1, 1], [], []>} : vector<32x4xf32>, vector<4x32xf32>, vector<32x32xf32> -> vector<32x32xf32>
    %c0_9 = arith.constant 0 : index
    %c0_10 = arith.constant 0 : index
    %14 = vector.load %arg3[%c0_9, %c0_10] : memref<4x32xf32, #tpu.memory_space<vmem>>, vector<4x32xf32>
    %cst_11 = arith.constant dense<0.000000e+00> : vector<32x32xf32>
    %15 = tpu.matmul %6, %14, %cst_11 {dimension_numbers = #tpu.dot_dimension_numbers<[1], [0], [0], [1], [0, 0, 1, 1], [], []>} : vector<32x4xf32>, vector<4x32xf32>, vector<32x32xf32> -> vector<32x32xf32>
    %16 = arith.addf %13, %15 : vector<32x32xf32>
    %c0_12 = arith.constant 0 : index
    %c0_13 = arith.constant 0 : index
    %17 = vector.load %arg4[%c0_12, %c0_13] : memref<1x32xf32, #tpu.memory_space<vmem>>, vector<1x32xf32>
    %18 = vector.broadcast %17 : vector<1x32xf32> to vector<32x32xf32>
    %19 = arith.addf %16, %18 : vector<32x32xf32>
    %cst_14 = arith.constant 0.000000e+00 : f32
    %20 = vector.broadcast %cst_14 : f32 to vector<32x32xf32>
    %21 = arith.maximumf %19, %20 : vector<32x32xf32>
    %cst_15 = arith.constant dense<0.000000e+00> : vector<32xf32>
    %22 = vector.multi_reduction <add>, %21, %cst_15 [0] : vector<32x32xf32> to vector<32xf32>
    %23 = vector.shape_cast %22 : vector<32xf32> to vector<1x32xf32>
    %cst_16 = arith.constant 3.200000e+01 : f32
    %24 = vector.broadcast %cst_16 : f32 to vector<1x32xf32>
    %25 = arith.divf %23, %24 : vector<1x32xf32>
    %26 = arith.mulf %21, %21 : vector<32x32xf32>
    %cst_17 = arith.constant dense<0.000000e+00> : vector<32xf32>
    %27 = vector.multi_reduction <add>, %26, %cst_17 [0] : vector<32x32xf32> to vector<32xf32>
    %28 = vector.shape_cast %27 : vector<32xf32> to vector<1x32xf32>
    %cst_18 = arith.constant 3.200000e+01 : f32
    %29 = vector.broadcast %cst_18 : f32 to vector<1x32xf32>
    %30 = arith.divf %28, %29 : vector<1x32xf32>
    %31 = arith.mulf %25, %25 : vector<1x32xf32>
    %32 = arith.subf %30, %31 : vector<1x32xf32>
    %cst_19 = arith.constant 0.000000e+00 : f32
    %33 = vector.broadcast %cst_19 : f32 to vector<1x32xf32>
    %34 = arith.maximumf %32, %33 : vector<1x32xf32>
    %35 = vector.broadcast %25 : vector<1x32xf32> to vector<32x32xf32>
    %36 = arith.subf %21, %35 : vector<32x32xf32>
    %cst_20 = arith.constant 9.99999974E-6 : f32
    %37 = vector.broadcast %cst_20 : f32 to vector<1x32xf32>
    %38 = arith.addf %34, %37 : vector<1x32xf32>
    %39 = math.rsqrt %38 : vector<1x32xf32>
    %40 = vector.broadcast %39 : vector<1x32xf32> to vector<32x32xf32>
    %41 = arith.mulf %36, %40 : vector<32x32xf32>
    %42 = vector.shape_cast %41 : vector<32x32xf32> to vector<2x16x32xf32>
    "tpu.trace_start"() <{level = 10 : i32, message = "bnm,bmc->bnc"}> : () -> ()
    %cst_21 = arith.constant dense<0.000000e+00> : vector<2x16x32xf32>
    %43 = tpu.matmul %0, %42, %cst_21 {dimension_numbers = #tpu.dot_dimension_numbers<[2], [1], [1], [2], [0, 0, 0, 1, 1, 2], [0], [0]>} : vector<2x16x16xf32>, vector<2x16x32xf32>, vector<2x16x32xf32> -> vector<2x16x32xf32>
    "tpu.trace_stop"() : () -> ()
    %44 = vector.broadcast %5 : vector<2x16x1xf32> to vector<2x16x32xf32>
    %45 = arith.mulf %43, %44 : vector<2x16x32xf32>
    %46 = vector.shape_cast %45 : vector<2x16x32xf32> to vector<32x32xf32>
    %c0_22 = arith.constant 0 : index
    %c0_23 = arith.constant 0 : index
    %47 = vector.load %arg5[%c0_22, %c0_23] : memref<32x32xf32, #tpu.memory_space<vmem>>, vector<32x32xf32>
    %cst_24 = arith.constant dense<0.000000e+00> : vector<32x32xf32>
    %48 = tpu.matmul %46, %47, %cst_24 {dimension_numbers = #tpu.dot_dimension_numbers<[1], [0], [0], [1], [0, 0, 1, 1], [], []>} : vector<32x32xf32>, vector<32x32xf32>, vector<32x32xf32> -> vector<32x32xf32>
    %c0_25 = arith.constant 0 : index
    %c0_26 = arith.constant 0 : index
    %49 = vector.load %arg6[%c0_25, %c0_26] : memref<32x32xf32, #tpu.memory_space<vmem>>, vector<32x32xf32>
    %cst_27 = arith.constant dense<0.000000e+00> : vector<32x32xf32>
    %50 = tpu.matmul %41, %49, %cst_27 {dimension_numbers = #tpu.dot_dimension_numbers<[1], [0], [0], [1], [0, 0, 1, 1], [], []>} : vector<32x32xf32>, vector<32x32xf32>, vector<32x32xf32> -> vector<32x32xf32>
    %51 = arith.addf %48, %50 : vector<32x32xf32>
    %c0_28 = arith.constant 0 : index
    %c0_29 = arith.constant 0 : index
    %52 = vector.load %arg7[%c0_28, %c0_29] : memref<1x32xf32, #tpu.memory_space<vmem>>, vector<1x32xf32>
    %53 = vector.broadcast %52 : vector<1x32xf32> to vector<32x32xf32>
    %54 = arith.addf %51, %53 : vector<32x32xf32>
    %cst_30 = arith.constant 0.000000e+00 : f32
    %55 = vector.broadcast %cst_30 : f32 to vector<32x32xf32>
    %56 = arith.maximumf %54, %55 : vector<32x32xf32>
    %cst_31 = arith.constant dense<0.000000e+00> : vector<32xf32>
    %57 = vector.multi_reduction <add>, %56, %cst_31 [0] : vector<32x32xf32> to vector<32xf32>
    %58 = vector.shape_cast %57 : vector<32xf32> to vector<1x32xf32>
    %cst_32 = arith.constant 3.200000e+01 : f32
    %59 = vector.broadcast %cst_32 : f32 to vector<1x32xf32>
    %60 = arith.divf %58, %59 : vector<1x32xf32>
    %61 = arith.mulf %56, %56 : vector<32x32xf32>
    %cst_33 = arith.constant dense<0.000000e+00> : vector<32xf32>
    %62 = vector.multi_reduction <add>, %61, %cst_33 [0] : vector<32x32xf32> to vector<32xf32>
    %63 = vector.shape_cast %62 : vector<32xf32> to vector<1x32xf32>
    %cst_34 = arith.constant 3.200000e+01 : f32
    %64 = vector.broadcast %cst_34 : f32 to vector<1x32xf32>
    %65 = arith.divf %63, %64 : vector<1x32xf32>
    %66 = arith.mulf %60, %60 : vector<1x32xf32>
    %67 = arith.subf %65, %66 : vector<1x32xf32>
    %cst_35 = arith.constant 0.000000e+00 : f32
    %68 = vector.broadcast %cst_35 : f32 to vector<1x32xf32>
    %69 = arith.maximumf %67, %68 : vector<1x32xf32>
    %70 = vector.broadcast %60 : vector<1x32xf32> to vector<32x32xf32>
    %71 = arith.subf %56, %70 : vector<32x32xf32>
    %cst_36 = arith.constant 9.99999974E-6 : f32
    %72 = vector.broadcast %cst_36 : f32 to vector<1x32xf32>
    %73 = arith.addf %69, %72 : vector<1x32xf32>
    %74 = math.rsqrt %73 : vector<1x32xf32>
    %75 = vector.broadcast %74 : vector<1x32xf32> to vector<32x32xf32>
    %76 = arith.mulf %71, %75 : vector<32x32xf32>
    %c0_37 = arith.constant 0 : index
    %c0_38 = arith.constant 0 : index
    %77 = vector.load %arg11[%c0_37, %c0_38] : memref<80x16xf32, #tpu.memory_space<vmem>>, vector<32x16xf32>
    %cst_39 = arith.constant dense<0.000000e+00> : vector<32x16xf32>
    %78 = tpu.matmul %41, %77, %cst_39 {dimension_numbers = #tpu.dot_dimension_numbers<[1], [0], [0], [1], [0, 0, 1, 1], [], []>} : vector<32x32xf32>, vector<32x16xf32>, vector<32x16xf32> -> vector<32x16xf32>
    %79 = vector.shape_cast %76 : vector<32x32xf32> to vector<2x16x32xf32>
    "tpu.trace_start"() <{level = 10 : i32, message = "bnm,bmc->bnc"}> : () -> ()
    %cst_40 = arith.constant dense<0.000000e+00> : vector<2x16x32xf32>
    %80 = tpu.matmul %0, %79, %cst_40 {dimension_numbers = #tpu.dot_dimension_numbers<[2], [1], [1], [2], [0, 0, 0, 1, 1, 2], [0], [0]>} : vector<2x16x16xf32>, vector<2x16x32xf32>, vector<2x16x32xf32> -> vector<2x16x32xf32>
    "tpu.trace_stop"() : () -> ()
    %81 = vector.broadcast %5 : vector<2x16x1xf32> to vector<2x16x32xf32>
    %82 = arith.mulf %80, %81 : vector<2x16x32xf32>
    %83 = vector.shape_cast %82 : vector<2x16x32xf32> to vector<32x32xf32>
    %c0_41 = arith.constant 0 : index
    %c0_42 = arith.constant 0 : index
    %84 = vector.load %arg8[%c0_41, %c0_42] : memref<32x16xf32, #tpu.memory_space<vmem>>, vector<32x16xf32>
    %cst_43 = arith.constant dense<0.000000e+00> : vector<32x16xf32>
    %85 = tpu.matmul %83, %84, %cst_43 {dimension_numbers = #tpu.dot_dimension_numbers<[1], [0], [0], [1], [0, 0, 1, 1], [], []>} : vector<32x32xf32>, vector<32x16xf32>, vector<32x16xf32> -> vector<32x16xf32>
    %c0_44 = arith.constant 0 : index
    %c0_45 = arith.constant 0 : index
    %86 = vector.load %arg9[%c0_44, %c0_45] : memref<32x16xf32, #tpu.memory_space<vmem>>, vector<32x16xf32>
    %cst_46 = arith.constant dense<0.000000e+00> : vector<32x16xf32>
    %87 = tpu.matmul %76, %86, %cst_46 {dimension_numbers = #tpu.dot_dimension_numbers<[1], [0], [0], [1], [0, 0, 1, 1], [], []>} : vector<32x32xf32>, vector<32x16xf32>, vector<32x16xf32> -> vector<32x16xf32>
    %88 = arith.addf %85, %87 : vector<32x16xf32>
    %c0_47 = arith.constant 0 : index
    %c0_48 = arith.constant 0 : index
    %89 = vector.load %arg10[%c0_47, %c0_48] : memref<1x16xf32, #tpu.memory_space<vmem>>, vector<1x16xf32>
    %90 = vector.broadcast %89 : vector<1x16xf32> to vector<32x16xf32>
    %91 = arith.addf %88, %90 : vector<32x16xf32>
    %cst_49 = arith.constant 0.000000e+00 : f32
    %92 = vector.broadcast %cst_49 : f32 to vector<32x16xf32>
    %93 = arith.maximumf %91, %92 : vector<32x16xf32>
    %cst_50 = arith.constant dense<0.000000e+00> : vector<16xf32>
    %94 = vector.multi_reduction <add>, %93, %cst_50 [0] : vector<32x16xf32> to vector<16xf32>
    %95 = vector.shape_cast %94 : vector<16xf32> to vector<1x16xf32>
    %cst_51 = arith.constant 3.200000e+01 : f32
    %96 = vector.broadcast %cst_51 : f32 to vector<1x16xf32>
    %97 = arith.divf %95, %96 : vector<1x16xf32>
    %98 = arith.mulf %93, %93 : vector<32x16xf32>
    %cst_52 = arith.constant dense<0.000000e+00> : vector<16xf32>
    %99 = vector.multi_reduction <add>, %98, %cst_52 [0] : vector<32x16xf32> to vector<16xf32>
    %100 = vector.shape_cast %99 : vector<16xf32> to vector<1x16xf32>
    %cst_53 = arith.constant 3.200000e+01 : f32
    %101 = vector.broadcast %cst_53 : f32 to vector<1x16xf32>
    %102 = arith.divf %100, %101 : vector<1x16xf32>
    %103 = arith.mulf %97, %97 : vector<1x16xf32>
    %104 = arith.subf %102, %103 : vector<1x16xf32>
    %cst_54 = arith.constant 0.000000e+00 : f32
    %105 = vector.broadcast %cst_54 : f32 to vector<1x16xf32>
    %106 = arith.maximumf %104, %105 : vector<1x16xf32>
    %107 = vector.broadcast %97 : vector<1x16xf32> to vector<32x16xf32>
    %108 = arith.subf %93, %107 : vector<32x16xf32>
    %cst_55 = arith.constant 9.99999974E-6 : f32
    %109 = vector.broadcast %cst_55 : f32 to vector<1x16xf32>
    %110 = arith.addf %106, %109 : vector<1x16xf32>
    %111 = math.rsqrt %110 : vector<1x16xf32>
    %112 = vector.broadcast %111 : vector<1x16xf32> to vector<32x16xf32>
    %113 = arith.mulf %108, %112 : vector<32x16xf32>
    %c32 = arith.constant 32 : index
    %c0_56 = arith.constant 0 : index
    %114 = vector.load %arg11[%c32, %c0_56] : memref<80x16xf32, #tpu.memory_space<vmem>>, vector<32x16xf32>
    %cst_57 = arith.constant dense<0.000000e+00> : vector<32x16xf32>
    %115 = tpu.matmul %76, %114, %cst_57 {dimension_numbers = #tpu.dot_dimension_numbers<[1], [0], [0], [1], [0, 0, 1, 1], [], []>} : vector<32x32xf32>, vector<32x16xf32>, vector<32x16xf32> -> vector<32x16xf32>
    %116 = arith.addf %78, %115 : vector<32x16xf32>
    %c64 = arith.constant 64 : index
    %c0_58 = arith.constant 0 : index
    %117 = vector.load %arg11[%c64, %c0_58] : memref<80x16xf32, #tpu.memory_space<vmem>>, vector<16x16xf32>
    %cst_59 = arith.constant dense<0.000000e+00> : vector<32x16xf32>
    %118 = tpu.matmul %113, %117, %cst_59 {dimension_numbers = #tpu.dot_dimension_numbers<[1], [0], [0], [1], [0, 0, 1, 1], [], []>} : vector<32x16xf32>, vector<16x16xf32>, vector<32x16xf32> -> vector<32x16xf32>
    %119 = arith.addf %116, %118 : vector<32x16xf32>
    %c0_60 = arith.constant 0 : index
    %c0_61 = arith.constant 0 : index
    %120 = vector.load %arg12[%c0_60, %c0_61] : memref<1x16xf32, #tpu.memory_space<vmem>>, vector<1x16xf32>
    %121 = vector.broadcast %120 : vector<1x16xf32> to vector<32x16xf32>
    %122 = arith.addf %119, %121 : vector<32x16xf32>
    %cst_62 = arith.constant 0.000000e+00 : f32
    %123 = vector.broadcast %cst_62 : f32 to vector<32x16xf32>
    %124 = arith.maximumf %122, %123 : vector<32x16xf32>
    %c0_63 = arith.constant 0 : index
    %c0_64 = arith.constant 0 : index
    %125 = vector.load %arg13[%c0_63, %c0_64] : memref<32x16xf32, #tpu.memory_space<vmem>>, vector<32x16xf32>
    tpu.vector_store %arg13[%c0_63, %c0_64], %124 {strides = array<i32>} : memref<32x16xf32, #tpu.memory_space<vmem>>, vector<32x16xf32>,
    return
  }
}

</mosaic_0001>

<llo_original>
// kernel: tpu_custom_call.1
$region0: #{tpu_custom_call.1}
  #allocation0 [shape = 'u32[]', space=smem, size = 0x4, offset = 0x4, fixed_abs, tag = 'smem constant byte address 0x4 - core index']
  #allocation1 [shape = 'u32[72,128]{1,0:T(1,128)}', space=vmem, size = 0x9000, scoped, tag = 'internal scratch']
  %s0 = inlined_call_operand.vmem [shape: f32[32,4], index: 0, kind: input, shape index: {}]
  %s1 = inlined_call_operand.vmem [shape: f32[2,16,16], index: 1, kind: input, shape index: {}]
  %s2 = inlined_call_operand.vmem [shape: f32[4,32], index: 2, kind: input, shape index: {}]
  %s3 = inlined_call_operand.vmem [shape: f32[4,32], index: 3, kind: input, shape index: {}]
  %s4 = inlined_call_operand.vmem [shape: f32[1,32], index: 4, kind: input, shape index: {}]
  %s5 = inlined_call_operand.vmem [shape: f32[32,32], index: 5, kind: input, shape index: {}]
  %s6 = inlined_call_operand.vmem [shape: f32[32,32], index: 6, kind: input, shape index: {}]
  %s7 = inlined_call_operand.vmem [shape: f32[1,32], index: 7, kind: input, shape index: {}]
  %s8 = inlined_call_operand.vmem [shape: f32[32,16], index: 8, kind: input, shape index: {}]
  %s9 = inlined_call_operand.vmem [shape: f32[32,16], index: 9, kind: input, shape index: {}]
  %s10 = inlined_call_operand.vmem [shape: f32[1,16], index: 10, kind: input, shape index: {}]
  %s11 = inlined_call_operand.vmem [shape: f32[80,16], index: 11, kind: input, shape index: {}]
  %s12 = inlined_call_operand.vmem [shape: f32[1,16], index: 12, kind: input, shape index: {}]
  %s13 = inlined_call_operand.vmem [shape: f32[32,16], index: 13, kind: output, shape index: {}]
  %s14 = sld [smem:[#allocation0]]
  $region62: #{tpu_custom_call.1} parent=0
    _
  %s16 = ssub.s32 1, %s14
  %s17 = scalar_select 0, %s16, %s14
  // Predicated region
  $region2: #{tpu_custom_call.1} parent=0 // pred_check
    _
  $region3: #{tpu_custom_call.1} parent=0 // pred_check_branch
    %19 = sbr.rel (0) target = $region5
  $region4: #{tpu_custom_call.1} parent=0 // pred_region
    _
  $region5: #{tpu_custom_call.1} parent=0 // pred_fallthru
    _
  // Predicated region
  $region6: #{tpu_custom_call.1} parent=0 // pred_check
    _
  $region7: #{tpu_custom_call.1} parent=0 // pred_check_branch
    %21 = sbr.rel (0) target = $region9
  $region8: #{tpu_custom_call.1} parent=0 // pred_region
    _
  $region9: #{tpu_custom_call.1} parent=0 // pred_fallthru
    _
  // Predicated region
  $region10: #{tpu_custom_call.1} parent=0 // pred_check
    _
  $region11: #{tpu_custom_call.1} parent=0 // pred_check_branch
    %23 = sbr.rel (0) target = $region13
  $region12: #{tpu_custom_call.1} parent=0 // pred_region
    _
  $region13: #{tpu_custom_call.1} parent=0 // pred_fallthru
    _
  // Predicated region
  $region14: #{tpu_custom_call.1} parent=0 // pred_check
    _
  $region15: #{tpu_custom_call.1} parent=0 // pred_check_branch
    %25 = sbr.rel (0) target = $region17
  $region16: #{tpu_custom_call.1} parent=0 // pred_region
    _
  $region17: #{tpu_custom_call.1} parent=0 // pred_fallthru
    _
  // Predicated region
  $region18: #{tpu_custom_call.1} parent=0 // pred_check
    _
  $region19: #{tpu_custom_call.1} parent=0 // pred_check_branch
    %27 = sbr.rel (0) target = $region21
  $region20: #{tpu_custom_call.1} parent=0 // pred_region
    _
  $region21: #{tpu_custom_call.1} parent=0 // pred_fallthru
    _
  // Predicated region
  $region22: #{tpu_custom_call.1} parent=0 // pred_check
    _
  $region23: #{tpu_custom_call.1} parent=0 // pred_check_branch
    %29 = sbr.rel (0) target = $region25
  $region24: #{tpu_custom_call.1} parent=0 // pred_region
    _
  $region25: #{tpu_custom_call.1} parent=0 // pred_fallthru
    _
  // Predicated region
  $region26: #{tpu_custom_call.1} parent=0 // pred_check
    _
  $region27: #{tpu_custom_call.1} parent=0 // pred_check_branch
    %31 = sbr.rel (0) target = $region29
  $region28: #{tpu_custom_call.1} parent=0 // pred_region
    _
  $region29: #{tpu_custom_call.1} parent=0 // pred_fallthru
    _
  // Predicated region
  $region30: #{tpu_custom_call.1} parent=0 // pred_check
    _
  $region31: #{tpu_custom_call.1} parent=0 // pred_check_branch
    %33 = sbr.rel (0) target = $region33
  $region32: #{tpu_custom_call.1} parent=0 // pred_region
    _
  $region33: #{tpu_custom_call.1} parent=0 // pred_fallthru
    _
  // Predicated region
  $region34: #{tpu_custom_call.1} parent=0 // pred_check
    _
  $region35: #{tpu_custom_call.1} parent=0 // pred_check_branch
    %35 = sbr.rel (0) target = $region37
  $region36: #{tpu_custom_call.1} parent=0 // pred_region
    _
  $region37: #{tpu_custom_call.1} parent=0 // pred_fallthru
    _
  // Predicated region
  $region38: #{tpu_custom_call.1} parent=0 // pred_check
    _
  $region39: #{tpu_custom_call.1} parent=0 // pred_check_branch
    %37 = sbr.rel (0) target = $region41
  $region40: #{tpu_custom_call.1} parent=0 // pred_region
    _
  $region41: #{tpu_custom_call.1} parent=0 // pred_fallthru
    _
  // Predicated region
  $region42: #{tpu_custom_call.1} parent=0 // pred_check
    _
  $region43: #{tpu_custom_call.1} parent=0 // pred_check_branch
    %39 = sbr.rel (0) target = $region45
  $region44: #{tpu_custom_call.1} parent=0 // pred_region
    _
  $region45: #{tpu_custom_call.1} parent=0 // pred_fallthru
    _
  // Predicated region
  $region46: #{tpu_custom_call.1} parent=0 // pred_check
    _
  $region47: #{tpu_custom_call.1} parent=0 // pred_check_branch
    %41 = sbr.rel (0) target = $region49
  $region48: #{tpu_custom_call.1} parent=0 // pred_region
    _
  $region49: #{tpu_custom_call.1} parent=0 // pred_fallthru
    _
  // Predicated region
  $region50: #{tpu_custom_call.1} parent=0 // pred_check
    _
  $region51: #{tpu_custom_call.1} parent=0 // pred_check_branch
    %43 = sbr.rel (0) target = $region53
  $region52: #{tpu_custom_call.1} parent=0 // pred_region
    _
  $region53: #{tpu_custom_call.1} parent=0 // pred_fallthru
    _
  %v44 = vld [vmem:[%s1] sm:$0xff]
  %v45 = vld [vmem:[%s1 + $0x8] sm:$0xff]
  %v46 = vld [vmem:[%s1 + $0x10] sm:$0xff]
  %v47 = vld [vmem:[%s1 + $0x18] sm:$0xff]
  %vm48 = vcmask 130048
  %v49 = vsel %vm48, %v44, 0.0
  %50 = vadd.xlane.f32.xlu0 %v49
  %v51 = vpop.xlane.xlu0 %50
  %v52 = vsel %vm48, %v45, 0.0
  %53 = vadd.xlane.f32.xlu0 %v52
  %v54 = vpop.xlane.xlu0 %53
  %v55 = vsel %vm48, %v46, 0.0
  %56 = vadd.xlane.f32.xlu0 %v55
  %v57 = vpop.xlane.xlu0 %56
  %v58 = vsel %vm48, %v47, 0.0
  %59 = vadd.xlane.f32.xlu0 %v58
  %v60 = vpop.xlane.xlu0 %59
  %v61 = vmax.f32 %v51, 1.0
  %v62 = vmax.f32 %v54, 1.0
  %v63 = vmax.f32 %v57, 1.0
  %v64 = vmax.f32 %v60, 1.0
  %v65 = vrcp.pop %v61
  %v66 = vmul.f32 %v61, %v65
  %v67 = vsub.f32 1.0, %v66
  %v68 = vmul.f32 %v65, %v67
  %v69 = vadd.f32 %v65, %v68
  %vm70 = vweird.f32 %v61
  %vm71 = vweird.f32 %v65
  %vm72 = vmor %vm70, %vm71
  %v73 = vsel %vm72, %v65, %v69
  %v74 = vand.u32 2147483647, %v61
  %vm75 = vcmp.eq.f32.partialorder %v74, 8.507059e+37
  %v76 = vand.u32 %v61, 2147483648
  %v77 = vor.u32 1.1754944e-38, %v76
  %v78 = vsel %vm75, %v77, %v73
  %v79 = vrcp.pop %v62
  %v80 = vmul.f32 %v62, %v79
  %v81 = vsub.f32 1.0, %v80
  %v82 = vmul.f32 %v79, %v81
  %v83 = vadd.f32 %v79, %v82
  %vm84 = vweird.f32 %v62
  %vm85 = vweird.f32 %v79
  %vm86 = vmor %vm84, %vm85
  %v87 = vsel %vm86, %v79, %v83
  %v88 = vand.u32 2147483647, %v62
  %vm89 = vcmp.eq.f32.partialorder %v88, 8.507059e+37
  %v90 = vand.u32 %v62, 2147483648
  %v91 = vor.u32 1.1754944e-38, %v90
  %v92 = vsel %vm89, %v91, %v87
  %v93 = vrcp.pop %v63
  %v94 = vmul.f32 %v63, %v93
  %v95 = vsub.f32 1.0, %v94
  %v96 = vmul.f32 %v93, %v95
  %v97 = vadd.f32 %v93, %v96
  %vm98 = vweird.f32 %v63
  %vm99 = vweird.f32 %v93
  %vm100 = vmor %vm98, %vm99
  %v101 = vsel %vm100, %v93, %v97
  %v102 = vand.u32 2147483647, %v63
  %vm103 = vcmp.eq.f32.partialorder %v102, 8.507059e+37
  %v104 = vand.u32 %v63, 2147483648
  %v105 = vor.u32 1.1754944e-38, %v104
  %v106 = vsel %vm103, %v105, %v101
  %v107 = vrcp.pop %v64
  %v108 = vmul.f32 %v64, %v107
  %v109 = vsub.f32 1.0, %v108
  %v110 = vmul.f32 %v107, %v109
  %v111 = vadd.f32 %v107, %v110
  %vm112 = vweird.f32 %v64
  %vm113 = vweird.f32 %v107
  %vm114 = vmor %vm112, %vm113
  %v115 = vsel %vm114, %v107, %v111
  %v116 = vand.u32 2147483647, %v64
  %vm117 = vcmp.eq.f32.partialorder %v116, 8.507059e+37
  %v118 = vand.u32 %v64, 2147483648
  %v119 = vor.u32 1.1754944e-38, %v118
  %v120 = vsel %vm117, %v119, %v115
  %v121 = vld [vmem:[%s0] sm:$0xff]
  %v122 = vld [vmem:[%s0 + $0x8] sm:$0xff]
  %v123 = vld [vmem:[%s0 + $0x10] sm:$0xff]
  %v124 = vld [vmem:[%s0 + $0x18] sm:$0xff]
  %v126 = vsel %vm48, %v44, 0
  %v129 = vsel %vm48, %v45, 0
  %131 = vmatpush.msra.mxu0 0.0
  %132 = vmatpush.msra.mxu0 0.0
  %133 = vmatpush.msra.mxu0 0.0
  %134 = vmatpush.msra.mxu0 0.0
  %135 = vmatpush.msra.mxu0 0.0
  %136 = vmatpush.msra.mxu0 0.0
  %137 = vmatpush.msra.mxu0 0.0
  %138 = vmatpush.msra.mxu0 0.0
  %139 = vmatpush.msra.mxu0 0.0
  %140 = vmatpush.msra.mxu0 0.0
  %141 = vmatpush.msra.mxu0 0.0
  %142 = vmatpush.msra.mxu0 0.0
  %143 = vmatpush.msra.mxu0 0.0
  %144 = vmatpush.msra.mxu0 0.0
  %145 = vmatpush.msra.mxu0 %v122
  %146 = vmatpush.msra.mxu0 %v121
  %147 = vmatmul.f32.gmra.mxu0 %v126
  %v148 = vpop.f32.mrf.mxu0
  %v149 = vadd.f32 0.0, %v148
  %150 = vmatmul.f32.gmra.mxu0 %v129
  %v151 = vpop.f32.mrf.mxu0
  %v152 = vadd.f32 0.0, %v151
  %153 = vdwg.mxu0
  %v155 = vsel %vm48, %v46, 0
  %v158 = vsel %vm48, %v47, 0
  %160 = vmatpush.msra.mxu0 0.0
  %161 = vmatpush.msra.mxu0 0.0
  %162 = vmatpush.msra.mxu0 0.0
  %163 = vmatpush.msra.mxu0 0.0
  %164 = vmatpush.msra.mxu0 0.0
  %165 = vmatpush.msra.mxu0 0.0
  %166 = vmatpush.msra.mxu0 0.0
  %167 = vmatpush.msra.mxu0 0.0
  %168 = vmatpush.msra.mxu0 0.0
  %169 = vmatpush.msra.mxu0 0.0
  %170 = vmatpush.msra.mxu0 0.0
  %171 = vmatpush.msra.mxu0 0.0
  %172 = vmatpush.msra.mxu0 0.0
  %173 = vmatpush.msra.mxu0 0.0
  %174 = vmatpush.msra.mxu0 %v124
  %175 = vmatpush.msra.mxu0 %v123
  %176 = vmatmul.f32.gmra.mxu0 %v155
  %v177 = vpop.f32.mrf.mxu0
  %v178 = vadd.f32 0.0, %v177
  %179 = vmatmul.f32.gmra.mxu0 %v158
  %v180 = vpop.f32.mrf.mxu0
  %v181 = vadd.f32 0.0, %v180
  %182 = vdwg.mxu0
  %v183 = vmul.f32 %v149, %v78
  %v184 = vmul.f32 %v152, %v92
  %v185 = vmul.f32 %v178, %v106
  %v186 = vmul.f32 %v181, %v120
  %v187 = vld [vmem:[%s2] sm:$0xf]
  %v188 = vld [vmem:[%s3] sm:$0xf]
  %vm189 = vcmask 31744
  %v191 = vsel %vm189, %v121, 0
  %v194 = vsel %vm189, %v122, 0
  %v197 = vsel %vm189, %v123, 0
  %v200 = vsel %vm189, %v124, 0
  %vm202 = vcmask 1043456
  %v204 = vsel %vm202, %v188, 0
  %206 = vmatpush.msra.mxu0 0.0
  %207 = vmatpush.msra.mxu0 0.0
  %208 = vmatpush.msra.mxu0 0.0
  %209 = vmatpush.msra.mxu0 0.0
  %210 = vmatpush.msra.mxu0 0.0
  %211 = vmatpush.msra.mxu0 0.0
  %212 = vmatpush.msra.mxu0 0.0
  %213 = vmatpush.msra.mxu0 0.0
  %214 = vmatpush.msra.mxu0 0.0
  %215 = vmatpush.msra.mxu0 0.0
  %216 = vmatpush.msra.mxu0 0.0
  %217 = vmatpush.msra.mxu0 0.0
  %218 = vmatpush.msra.mxu0 0.0
  %219 = vmatpush.msra.mxu0 0.0
  %220 = vmatpush.msra.mxu0 0.0
  %221 = vmatpush.msra.mxu0 %v204
  %222 = vmatmul.f32.gmra.mxu0 %v191
  %v223 = vpop.f32.mrf.mxu0
  %v224 = vadd.f32 0.0, %v223
  %225 = vmatmul.f32.gmra.mxu0 %v194
  %v226 = vpop.f32.mrf.mxu0
  %v227 = vadd.f32 0.0, %v226
  %228 = vmatmul.f32.gmra.mxu0 %v197
  %v229 = vpop.f32.mrf.mxu0
  %v230 = vadd.f32 0.0, %v229
  %231 = vmatmul.f32.gmra.mxu0 %v200
  %v232 = vpop.f32.mrf.mxu0
  %v233 = vadd.f32 0.0, %v232
  %234 = vdwg.mxu0
  %v236 = vsel %vm189, %v183, 0
  %v239 = vsel %vm189, %v184, 0
  %v242 = vsel %vm189, %v185, 0
  %v245 = vsel %vm189, %v186, 0
  %v248 = vsel %vm202, %v187, 0
  %250 = vmatpush.msra.mxu0 0.0
  %251 = vmatpush.msra.mxu0 0.0
  %252 = vmatpush.msra.mxu0 0.0
  %253 = vmatpush.msra.mxu0 0.0
  %254 = vmatpush.msra.mxu0 0.0
  %255 = vmatpush.msra.mxu0 0.0
  %256 = vmatpush.msra.mxu0 0.0
  %257 = vmatpush.msra.mxu0 0.0
  %258 = vmatpush.msra.mxu0 0.0
  %259 = vmatpush.msra.mxu0 0.0
  %260 = vmatpush.msra.mxu0 0.0
  %261 = vmatpush.msra.mxu0 0.0
  %262 = vmatpush.msra.mxu0 0.0
  %263 = vmatpush.msra.mxu0 0.0
  %264 = vmatpush.msra.mxu0 0.0
  %265 = vmatpush.msra.mxu0 %v248
  %266 = vmatmul.f32.gmra.mxu0 %v236
  %v267 = vpop.f32.mrf.mxu0
  %v268 = vadd.f32 %v224, %v267
  %269 = vmatmul.f32.gmra.mxu0 %v239
  %v270 = vpop.f32.mrf.mxu0
  %v271 = vadd.f32 %v227, %v270
  %272 = vmatmul.f32.gmra.mxu0 %v242
  %v273 = vpop.f32.mrf.mxu0
  %v274 = vadd.f32 %v230, %v273
  %275 = vmatmul.f32.gmra.mxu0 %v245
  %v276 = vpop.f32.mrf.mxu0
  %v277 = vadd.f32 %v233, %v276
  %278 = vdwg.mxu0
  %v279 = vld [vmem:[%s4] sm:$0x1]
  %v281 = vperm.slane %v279, 0
  %v283 = vadd.f32 %v268, %v281
  %v284 = vadd.f32 %v271, %v281
  %v285 = vadd.f32 %v274, %v281
  %v286 = vadd.f32 %v277, %v281
  %v287 = vmax.f32 %v283, 0.0
  %v288 = vmax.f32 %v284, 0.0
  %v289 = vmax.f32 %v285, 0.0
  %v290 = vmax.f32 %v286, 0.0
  %vm291 = vcmask 261120
  %v292 = vsel %vm291, %v287, 0.0
  %v293 = vsel %vm291, %v288, 0.0
  %v294 = vadd.f32 %v292, %v293
  %v295 = vsel %vm291, %v289, 0.0
  %v296 = vadd.f32 %v294, %v295
  %v297 = vsel %vm291, %v290, 0.0
  %v298 = vadd.f32 %v296, %v297
  %v299 = vrot.slane %v298, 4
  %v300 = vadd.f32 %v298, %v299
  %v301 = vrot.slane %v300, 2
  %v302 = vadd.f32 %v300, %v301
  %v303 = vrot.slane %v302, 1
  %v304 = vadd.f32 %v302, %v303
  %v305 = vrcp.pop 32.0
  %v306 = vmul.f32 32.0, %v305
  %v307 = vsub.f32 1.0, %v306
  %v308 = vmul.f32 %v305, %v307
  %v309 = vadd.f32 %v305, %v308
  %vm310 = vweird.f32 %v305
  %v311 = vsel %vm310, %v305, %v309
  %v312 = vmul.f32 %v304, %v311
  %v313 = vmul.f32 %v287, %v287
  %v314 = vmul.f32 %v288, %v288
  %v315 = vmul.f32 %v289, %v289
  %v316 = vmul.f32 %v290, %v290
  %v317 = vsel %vm291, %v313, 0.0
  %v318 = vsel %vm291, %v314, 0.0
  %v319 = vadd.f32 %v317, %v318
  %v320 = vsel %vm291, %v315, 0.0
  %v321 = vadd.f32 %v319, %v320
  %v322 = vsel %vm291, %v316, 0.0
  %v323 = vadd.f32 %v321, %v322
  %v324 = vrot.slane %v323, 4
  %v325 = vadd.f32 %v323, %v324
  %v326 = vrot.slane %v325, 2
  %v327 = vadd.f32 %v325, %v326
  %v328 = vrot.slane %v327, 1
  %v329 = vadd.f32 %v327, %v328
  %v330 = vmul.f32 %v329, %v311
  %v331 = vmul.f32 %v312, %v312
  %v332 = vsub.f32 %v330, %v331
  %v333 = vmax.f32 %v332, 0.0
  %v334 = vsub.f32 %v287, %v312
  %v335 = vsub.f32 %v288, %v312
  %v336 = vsub.f32 %v289, %v312
  %v337 = vsub.f32 %v290, %v312
  %v338 = vadd.f32 %v333, 1e-05
  %v339 = vrsqrt.pop %v338
  %v340 = vmul.f32 %v339, %v338
  %v341 = vmul.f32 %v340, %v339
  %v342 = vmul.f32 0.5, %v341
  %v343 = vsub.f32 1.5, %v342
  %v344 = vmul.f32 %v339, %v343
  %vm345 = vweird.f32 %v338
  %vm346 = vweird.f32 %v339
  %vm347 = vmor %vm345, %vm346
  %v348 = vsel %vm347, %v339, %v344
  %v349 = vmul.f32 %v334, %v348
  %v350 = vmul.f32 %v335, %v348
  %v351 = vmul.f32 %v336, %v348
  %v352 = vmul.f32 %v337, %v348
  %353 = vmatpush.msra.mxu0 0.0
  %354 = vmatpush.msra.mxu0 0.0
  %355 = vmatpush.msra.mxu0 0.0
  %356 = vmatpush.msra.mxu0 0.0
  %357 = vmatpush.msra.mxu0 0.0
  %358 = vmatpush.msra.mxu0 0.0
  %359 = vmatpush.msra.mxu0 0.0
  %360 = vmatpush.msra.mxu0 0.0
  %361 = vmatpush.msra.mxu0 0.0
  %362 = vmatpush.msra.mxu0 0.0
  %363 = vmatpush.msra.mxu0 0.0
  %364 = vmatpush.msra.mxu0 0.0
  %365 = vmatpush.msra.mxu0 0.0
  %366 = vmatpush.msra.mxu0 0.0
  %367 = vmatpush.msra.mxu0 %v350
  %368 = vmatpush.msra.mxu0 %v349
  %369 = vmatmul.f32.gmra.mxu0 %v126
  %v370 = vpop.f32.mrf.mxu0
  %v371 = vadd.f32 0.0, %v370
  %372 = vmatmul.f32.gmra.mxu0 %v129
  %v373 = vpop.f32.mrf.mxu0
  %v374 = vadd.f32 0.0, %v373
  %375 = vdwg.mxu0
  %376 = vmatpush.msra.mxu0 0.0
  %377 = vmatpush.msra.mxu0 0.0
  %378 = vmatpush.msra.mxu0 0.0
  %379 = vmatpush.msra.mxu0 0.0
  %380 = vmatpush.msra.mxu0 0.0
  %381 = vmatpush.msra.mxu0 0.0
  %382 = vmatpush.msra.mxu0 0.0
  %383 = vmatpush.msra.mxu0 0.0
  %384 = vmatpush.msra.mxu0 0.0
  %385 = vmatpush.msra.mxu0 0.0
  %386 = vmatpush.msra.mxu0 0.0
  %387 = vmatpush.msra.mxu0 0.0
  %388 = vmatpush.msra.mxu0 0.0
  %389 = vmatpush.msra.mxu0 0.0
  %390 = vmatpush.msra.mxu0 %v352
  %391 = vmatpush.msra.mxu0 %v351
  %392 = vmatmul.f32.gmra.mxu0 %v155
  %v393 = vpop.f32.mrf.mxu0
  %v394 = vadd.f32 0.0, %v393
  %395 = vmatmul.f32.gmra.mxu0 %v158
  %v396 = vpop.f32.mrf.mxu0
  %v397 = vadd.f32 0.0, %v396
  %398 = vdwg.mxu0
  %v399 = vmul.f32 %v371, %v78
  %v400 = vmul.f32 %v374, %v92
  %v401 = vmul.f32 %v394, %v106
  %v402 = vmul.f32 %v397, %v120
  %v403 = vld [vmem:[%s5] sm:$0xff]
  %v404 = vld [vmem:[%s5 + $0x8] sm:$0xff]
  %v405 = vld [vmem:[%s5 + $0x10] sm:$0xff]
  %v406 = vld [vmem:[%s5 + $0x18] sm:$0xff]
  %v407 = vld [vmem:[%s6] sm:$0xff]
  %v408 = vld [vmem:[%s6 + $0x8] sm:$0xff]
  %v409 = vld [vmem:[%s6 + $0x10] sm:$0xff]
  %v410 = vld [vmem:[%s6 + $0x18] sm:$0xff]
  %v412 = vsel %vm291, %v349, 0
  %v415 = vsel %vm291, %v350, 0
  %v418 = vsel %vm291, %v351, 0
  %v421 = vsel %vm291, %v352, 0
  %423 = vmatpush.msra.mxu0 0.0
  %424 = vmatpush.msra.mxu0 0.0
  %425 = vmatpush.msra.mxu0 0.0
  %426 = vmatpush.msra.mxu0 0.0
  %427 = vmatpush.msra.mxu0 0.0
  %428 = vmatpush.msra.mxu0 0.0
  %429 = vmatpush.msra.mxu0 0.0
  %430 = vmatpush.msra.mxu0 0.0
  %431 = vmatpush.msra.mxu0 0.0
  %432 = vmatpush.msra.mxu0 0.0
  %433 = vmatpush.msra.mxu0 0.0
  %434 = vmatpush.msra.mxu0 0.0
  %435 = vmatpush.msra.mxu0 %v410
  %436 = vmatpush.msra.mxu0 %v409
  %437 = vmatpush.msra.mxu0 %v408
  %438 = vmatpush.msra.mxu0 %v407
  %439 = vmatmul.f32.gmra.mxu0 %v412
  %v440 = vpop.f32.mrf.mxu0
  %v441 = vadd.f32 0.0, %v440
  %442 = vmatmul.f32.gmra.mxu0 %v415
  %v443 = vpop.f32.mrf.mxu0
  %v444 = vadd.f32 0.0, %v443
  %445 = vmatmul.f32.gmra.mxu0 %v418
  %v446 = vpop.f32.mrf.mxu0
  %v447 = vadd.f32 0.0, %v446
  %448 = vmatmul.f32.gmra.mxu0 %v421
  %v449 = vpop.f32.mrf.mxu0
  %v450 = vadd.f32 0.0, %v449
  %451 = vdwg.mxu0
  %v453 = vsel %vm291, %v399, 0
  %v456 = vsel %vm291, %v400, 0
  %v459 = vsel %vm291, %v401, 0
  %v462 = vsel %vm291, %v402, 0
  %464 = vmatpush.msra.mxu0 0.0
  %465 = vmatpush.msra.mxu0 0.0
  %466 = vmatpush.msra.mxu0 0.0
  %467 = vmatpush.msra.mxu0 0.0
  %468 = vmatpush.msra.mxu0 0.0
  %469 = vmatpush.msra.mxu0 0.0
  %470 = vmatpush.msra.mxu0 0.0
  %471 = vmatpush.msra.mxu0 0.0
  %472 = vmatpush.msra.mxu0 0.0
  %473 = vmatpush.msra.mxu0 0.0
  %474 = vmatpush.msra.mxu0 0.0
  %475 = vmatpush.msra.mxu0 0.0
  %476 = vmatpush.msra.mxu0 %v406
  %477 = vmatpush.msra.mxu0 %v405
  %478 = vmatpush.msra.mxu0 %v404
  %479 = vmatpush.msra.mxu0 %v403
  %480 = vmatmul.f32.gmra.mxu0 %v453
  %v481 = vpop.f32.mrf.mxu0
  %v482 = vadd.f32 %v441, %v481
  %483 = vmatmul.f32.gmra.mxu0 %v456
  %v484 = vpop.f32.mrf.mxu0
  %v485 = vadd.f32 %v444, %v484
  %486 = vmatmul.f32.gmra.mxu0 %v459
  %v487 = vpop.f32.mrf.mxu0
  %v488 = vadd.f32 %v447, %v487
  %489 = vmatmul.f32.gmra.mxu0 %v462
  %v490 = vpop.f32.mrf.mxu0
  %v491 = vadd.f32 %v450, %v490
  %492 = vdwg.mxu0
  %v493 = vld [vmem:[%s7] sm:$0x1]
  %v495 = vperm.slane %v493, 0
  %v497 = vadd.f32 %v482, %v495
  %v498 = vadd.f32 %v485, %v495
  %v499 = vadd.f32 %v488, %v495
  %v500 = vadd.f32 %v491, %v495
  %v501 = vmax.f32 %v497, 0.0
  %v502 = vmax.f32 %v498, 0.0
  %v503 = vmax.f32 %v499, 0.0
  %v504 = vmax.f32 %v500, 0.0
  %v505 = vsel %vm291, %v501, 0.0
  %v506 = vsel %vm291, %v502, 0.0
  %v507 = vadd.f32 %v505, %v506
  %v508 = vsel %vm291, %v503, 0.0
  %v509 = vadd.f32 %v507, %v508
  %v510 = vsel %vm291, %v504, 0.0
  %v511 = vadd.f32 %v509, %v510
  %v512 = vrot.slane %v511, 4
  %v513 = vadd.f32 %v511, %v512
  %v514 = vrot.slane %v513, 2
  %v515 = vadd.f32 %v513, %v514
  %v516 = vrot.slane %v515, 1
  %v517 = vadd.f32 %v515, %v516
  %v518 = vmul.f32 %v517, %v311
  %v519 = vmul.f32 %v501, %v501
  %v520 = vmul.f32 %v502, %v502
  %v521 = vmul.f32 %v503, %v503
  %v522 = vmul.f32 %v504, %v504
  %v523 = vsel %vm291, %v519, 0.0
  %v524 = vsel %vm291, %v520, 0.0
  %v525 = vadd.f32 %v523, %v524
  %v526 = vsel %vm291, %v521, 0.0
  %v527 = vadd.f32 %v525, %v526
  %v528 = vsel %vm291, %v522, 0.0
  %v529 = vadd.f32 %v527, %v528
  %v530 = vrot.slane %v529, 4
  %v531 = vadd.f32 %v529, %v530
  %v532 = vrot.slane %v531, 2
  %v533 = vadd.f32 %v531, %v532
  %v534 = vrot.slane %v533, 1
  %v535 = vadd.f32 %v533, %v534
  %v536 = vmul.f32 %v535, %v311
  %v537 = vmul.f32 %v518, %v518
  %v538 = vsub.f32 %v536, %v537
  %v539 = vmax.f32 %v538, 0.0
  %v540 = vsub.f32 %v501, %v518
  %v541 = vsub.f32 %v502, %v518
  %v542 = vsub.f32 %v503, %v518
  %v543 = vsub.f32 %v504, %v518
  %v544 = vadd.f32 %v539, 1e-05
  %v545 = vrsqrt.pop %v544
  %v546 = vmul.f32 %v545, %v544
  %v547 = vmul.f32 %v546, %v545
  %v548 = vmul.f32 0.5, %v547
  %v549 = vsub.f32 1.5, %v548
  %v550 = vmul.f32 %v545, %v549
  %vm551 = vweird.f32 %v544
  %vm552 = vweird.f32 %v545
  %vm553 = vmor %vm551, %vm552
  %v554 = vsel %vm553, %v545, %v550
  %v555 = vmul.f32 %v540, %v554
  %v556 = vmul.f32 %v541, %v554
  %v557 = vmul.f32 %v542, %v554
  %v558 = vmul.f32 %v543, %v554
  %v559 = vld [vmem:[%s11] sm:$0xff]
  %v560 = vld [vmem:[%s11 + $0x8] sm:$0xff]
  %v561 = vld [vmem:[%s11 + $0x10] sm:$0xff]
  %v562 = vld [vmem:[%s11 + $0x18] sm:$0xff]
  %563 = vmatpush.msra.mxu0 0.0
  %564 = vmatpush.msra.mxu0 0.0
  %565 = vmatpush.msra.mxu0 0.0
  %566 = vmatpush.msra.mxu0 0.0
  %567 = vmatpush.msra.mxu0 0.0
  %568 = vmatpush.msra.mxu0 0.0
  %569 = vmatpush.msra.mxu0 0.0
  %570 = vmatpush.msra.mxu0 0.0
  %571 = vmatpush.msra.mxu0 0.0
  %572 = vmatpush.msra.mxu0 0.0
  %573 = vmatpush.msra.mxu0 0.0
  %574 = vmatpush.msra.mxu0 0.0
  %575 = vmatpush.msra.mxu0 0.0
  %576 = vmatpush.msra.mxu0 0.0
  %577 = vmatpush.msra.mxu0 %v556
  %578 = vmatpush.msra.mxu0 %v555
  %579 = vmatmul.f32.gmra.mxu0 %v126
  %v580 = vpop.f32.mrf.mxu0
  %v581 = vadd.f32 0.0, %v580
  %582 = vmatmul.f32.gmra.mxu0 %v129
  %v583 = vpop.f32.mrf.mxu0
  %v584 = vadd.f32 0.0, %v583
  %585 = vdwg.mxu0
  %586 = vmatpush.msra.mxu0 0.0
  %587 = vmatpush.msra.mxu0 0.0
  %588 = vmatpush.msra.mxu0 0.0
  %589 = vmatpush.msra.mxu0 0.0
  %590 = vmatpush.msra.mxu0 0.0
  %591 = vmatpush.msra.mxu0 0.0
  %592 = vmatpush.msra.mxu0 0.0
  %593 = vmatpush.msra.mxu0 0.0
  %594 = vmatpush.msra.mxu0 0.0
  %595 = vmatpush.msra.mxu0 0.0
  %596 = vmatpush.msra.mxu0 0.0
  %597 = vmatpush.msra.mxu0 0.0
  %598 = vmatpush.msra.mxu0 0.0
  %599 = vmatpush.msra.mxu0 0.0
  %600 = vmatpush.msra.mxu0 %v558
  %601 = vmatpush.msra.mxu0 %v557
  %602 = vmatmul.f32.gmra.mxu0 %v155
  %v603 = vpop.f32.mrf.mxu0
  %v604 = vadd.f32 0.0, %v603
  %605 = vmatmul.f32.gmra.mxu0 %v158
  %v606 = vpop.f32.mrf.mxu0
  %v607 = vadd.f32 0.0, %v606
  %608 = vdwg.mxu0
  %v609 = vmul.f32 %v581, %v78
  %v610 = vmul.f32 %v584, %v92
  %v611 = vmul.f32 %v604, %v106
  %v612 = vmul.f32 %v607, %v120
  %v613 = vld [vmem:[%s8] sm:$0xff]
  %v614 = vld [vmem:[%s8 + $0x8] sm:$0xff]
  %v615 = vld [vmem:[%s8 + $0x10] sm:$0xff]
  %v616 = vld [vmem:[%s8 + $0x18] sm:$0xff]
  %v617 = vld [vmem:[%s9] sm:$0xff]
  %v618 = vld [vmem:[%s9 + $0x8] sm:$0xff]
  %v619 = vld [vmem:[%s9 + $0x10] sm:$0xff]
  %v620 = vld [vmem:[%s9 + $0x18] sm:$0xff]
  %v622 = vsel %vm291, %v555, 0
  %v625 = vsel %vm291, %v556, 0
  %v628 = vsel %vm291, %v557, 0
  %v631 = vsel %vm291, %v558, 0
  %633 = vmatpush.msra.mxu0 0.0
  %634 = vmatpush.msra.mxu0 0.0
  %635 = vmatpush.msra.mxu0 0.0
  %636 = vmatpush.msra.mxu0 0.0
  %637 = vmatpush.msra.mxu0 0.0
  %638 = vmatpush.msra.mxu0 0.0
  %639 = vmatpush.msra.mxu0 0.0
  %640 = vmatpush.msra.mxu0 0.0
  %641 = vmatpush.msra.mxu0 0.0
  %642 = vmatpush.msra.mxu0 0.0
  %643 = vmatpush.msra.mxu0 0.0
  %644 = vmatpush.msra.mxu0 0.0
  %645 = vmatpush.msra.mxu0 %v620
  %646 = vmatpush.msra.mxu0 %v619
  %647 = vmatpush.msra.mxu0 %v618
  %648 = vmatpush.msra.mxu0 %v617
  %649 = vmatmul.f32.gmra.mxu0 %v622
  %v650 = vpop.f32.mrf.mxu0
  %v651 = vadd.f32 0.0, %v650
  %652 = vmatmul.f32.gmra.mxu0 %v625
  %v653 = vpop.f32.mrf.mxu0
  %v654 = vadd.f32 0.0, %v653
  %655 = vmatmul.f32.gmra.mxu0 %v628
  %v656 = vpop.f32.mrf.mxu0
  %v657 = vadd.f32 0.0, %v656
  %658 = vmatmul.f32.gmra.mxu0 %v631
  %v659 = vpop.f32.mrf.mxu0
  %v660 = vadd.f32 0.0, %v659
  %661 = vdwg.mxu0
  %v663 = vsel %vm291, %v609, 0
  %v666 = vsel %vm291, %v610, 0
  %v669 = vsel %vm291, %v611, 0
  %v672 = vsel %vm291, %v612, 0
  %674 = vmatpush.msra.mxu0 0.0
  %675 = vmatpush.msra.mxu0 0.0
  %676 = vmatpush.msra.mxu0 0.0
  %677 = vmatpush.msra.mxu0 0.0
  %678 = vmatpush.msra.mxu0 0.0
  %679 = vmatpush.msra.mxu0 0.0
  %680 = vmatpush.msra.mxu0 0.0
  %681 = vmatpush.msra.mxu0 0.0
  %682 = vmatpush.msra.mxu0 0.0
  %683 = vmatpush.msra.mxu0 0.0
  %684 = vmatpush.msra.mxu0 0.0
  %685 = vmatpush.msra.mxu0 0.0
  %686 = vmatpush.msra.mxu0 %v616
  %687 = vmatpush.msra.mxu0 %v615
  %688 = vmatpush.msra.mxu0 %v614
  %689 = vmatpush.msra.mxu0 %v613
  %690 = vmatmul.f32.gmra.mxu0 %v663
  %v691 = vpop.f32.mrf.mxu0
  %v692 = vadd.f32 %v651, %v691
  %693 = vmatmul.f32.gmra.mxu0 %v666
  %v694 = vpop.f32.mrf.mxu0
  %v695 = vadd.f32 %v654, %v694
  %696 = vmatmul.f32.gmra.mxu0 %v669
  %v697 = vpop.f32.mrf.mxu0
  %v698 = vadd.f32 %v657, %v697
  %699 = vmatmul.f32.gmra.mxu0 %v672
  %v700 = vpop.f32.mrf.mxu0
  %v701 = vadd.f32 %v660, %v700
  %702 = vdwg.mxu0
  %v703 = vld [vmem:[%s10] sm:$0x1]
  %v705 = vperm.slane %v703, 0
  %v707 = vadd.f32 %v692, %v705
  %v708 = vadd.f32 %v695, %v705
  %v709 = vadd.f32 %v698, %v705
  %v710 = vadd.f32 %v701, %v705
  %v711 = vmax.f32 %v707, 0.0
  %v712 = vmax.f32 %v708, 0.0
  %v713 = vmax.f32 %v709, 0.0
  %v714 = vmax.f32 %v710, 0.0
  %v715 = vsel %vm48, %v711, 0.0
  %v716 = vsel %vm48, %v712, 0.0
  %v717 = vadd.f32 %v715, %v716
  %v718 = vsel %vm48, %v713, 0.0
  %v719 = vadd.f32 %v717, %v718
  %v720 = vsel %vm48, %v714, 0.0
  %v721 = vadd.f32 %v719, %v720
  %v722 = vrot.slane %v721, 4
  %v723 = vadd.f32 %v721, %v722
  %v724 = vrot.slane %v723, 2
  %v725 = vadd.f32 %v723, %v724
  %v726 = vrot.slane %v725, 1
  %v727 = vadd.f32 %v725, %v726
  %v728 = vmul.f32 %v727, %v311
  %v729 = vmul.f32 %v711, %v711
  %v730 = vmul.f32 %v712, %v712
  %v731 = vmul.f32 %v713, %v713
  %v732 = vmul.f32 %v714, %v714
  %v733 = vsel %vm48, %v729, 0.0
  %v734 = vsel %vm48, %v730, 0.0
  %v735 = vadd.f32 %v733, %v734
  %v736 = vsel %vm48, %v731, 0.0
  %v737 = vadd.f32 %v735, %v736
  %v738 = vsel %vm48, %v732, 0.0
  %v739 = vadd.f32 %v737, %v738
  %v740 = vrot.slane %v739, 4
  %v741 = vadd.f32 %v739, %v740
  %v742 = vrot.slane %v741, 2
  %v743 = vadd.f32 %v741, %v742
  %v744 = vrot.slane %v743, 1
  %v745 = vadd.f32 %v743, %v744
  %v746 = vmul.f32 %v745, %v311
  %v747 = vmul.f32 %v728, %v728
  %v748 = vsub.f32 %v746, %v747
  %v749 = vmax.f32 %v748, 0.0
  %v750 = vsub.f32 %v711, %v728
  %v751 = vsub.f32 %v712, %v728
  %v752 = vsub.f32 %v713, %v728
  %v753 = vsub.f32 %v714, %v728
  %v754 = vadd.f32 %v749, 1e-05
  %v755 = vrsqrt.pop %v754
  %v756 = vmul.f32 %v755, %v754
  %v757 = vmul.f32 %v756, %v755
  %v758 = vmul.f32 0.5, %v757
  %v759 = vsub.f32 1.5, %v758
  %v760 = vmul.f32 %v755, %v759
  %vm761 = vweird.f32 %v754
  %vm762 = vweird.f32 %v755
  %vm763 = vmor %vm761, %vm762
  %v764 = vsel %vm763, %v755, %v760
  %v765 = vmul.f32 %v750, %v764
  %v766 = vmul.f32 %v751, %v764
  %v767 = vmul.f32 %v752, %v764
  %v768 = vmul.f32 %v753, %v764
  %v769 = vld [vmem:[%s11 + $0x20] sm:$0xff]
  %v770 = vld [vmem:[%s11 + $0x28] sm:$0xff]
  %v771 = vld [vmem:[%s11 + $0x30] sm:$0xff]
  %v772 = vld [vmem:[%s11 + $0x38] sm:$0xff]
  %773 = vmatpush.msra.mxu0 0.0
  %774 = vmatpush.msra.mxu0 0.0
  %775 = vmatpush.msra.mxu0 0.0
  %776 = vmatpush.msra.mxu0 0.0
  %777 = vmatpush.msra.mxu0 0.0
  %778 = vmatpush.msra.mxu0 0.0
  %779 = vmatpush.msra.mxu0 0.0
  %780 = vmatpush.msra.mxu0 0.0
  %781 = vmatpush.msra.mxu0 0.0
  %782 = vmatpush.msra.mxu0 0.0
  %783 = vmatpush.msra.mxu0 0.0
  %784 = vmatpush.msra.mxu0 0.0
  %785 = vmatpush.msra.mxu0 %v772
  %786 = vmatpush.msra.mxu0 %v771
  %787 = vmatpush.msra.mxu0 %v770
  %788 = vmatpush.msra.mxu0 %v769
  %789 = vmatmul.f32.gmra.mxu0 %v622
  %v790 = vpop.f32.mrf.mxu0
  %v791 = vadd.f32 0.0, %v790
  %792 = vmatmul.f32.gmra.mxu0 %v625
  %v793 = vpop.f32.mrf.mxu0
  %v794 = vadd.f32 0.0, %v793
  %795 = vmatmul.f32.gmra.mxu0 %v628
  %v796 = vpop.f32.mrf.mxu0
  %v797 = vadd.f32 0.0, %v796
  %798 = vmatmul.f32.gmra.mxu0 %v631
  %v799 = vpop.f32.mrf.mxu0
  %v800 = vadd.f32 0.0, %v799
  %801 = vdwg.mxu0
  %802 = vmatpush.msra.mxu0 0.0
  %803 = vmatpush.msra.mxu0 0.0
  %804 = vmatpush.msra.mxu0 0.0
  %805 = vmatpush.msra.mxu0 0.0
  %806 = vmatpush.msra.mxu0 0.0
  %807 = vmatpush.msra.mxu0 0.0
  %808 = vmatpush.msra.mxu0 0.0
  %809 = vmatpush.msra.mxu0 0.0
  %810 = vmatpush.msra.mxu0 0.0
  %811 = vmatpush.msra.mxu0 0.0
  %812 = vmatpush.msra.mxu0 0.0
  %813 = vmatpush.msra.mxu0 0.0
  %814 = vmatpush.msra.mxu0 %v562
  %815 = vmatpush.msra.mxu0 %v561
  %816 = vmatpush.msra.mxu0 %v560
  %817 = vmatpush.msra.mxu0 %v559
  %818 = vmatmul.f32.gmra.mxu0 %v412
  %v819 = vpop.f32.mrf.mxu0
  %v820 = vadd.f32 %v791, %v819
  %821 = vmatmul.f32.gmra.mxu0 %v415
  %v822 = vpop.f32.mrf.mxu0
  %v823 = vadd.f32 %v794, %v822
  %824 = vmatmul.f32.gmra.mxu0 %v418
  %v825 = vpop.f32.mrf.mxu0
  %v826 = vadd.f32 %v797, %v825
  %827 = vmatmul.f32.gmra.mxu0 %v421
  %v828 = vpop.f32.mrf.mxu0
  %v829 = vadd.f32 %v800, %v828
  %830 = vdwg.mxu0
  %v831 = vld [vmem:[%s11 + $0x40] sm:$0xff]
  %v832 = vld [vmem:[%s11 + $0x48] sm:$0xff]
  %v834 = vsel %vm48, %v765, 0
  %v837 = vsel %vm48, %v766, 0
  %v840 = vsel %vm48, %v767, 0
  %v843 = vsel %vm48, %v768, 0
  %845 = vmatpush.msra.mxu0 0.0
  %846 = vmatpush.msra.mxu0 0.0
  %847 = vmatpush.msra.mxu0 0.0
  %848 = vmatpush.msra.mxu0 0.0
  %849 = vmatpush.msra.mxu0 0.0
  %850 = vmatpush.msra.mxu0 0.0
  %851 = vmatpush.msra.mxu0 0.0
  %852 = vmatpush.msra.mxu0 0.0
  %853 = vmatpush.msra.mxu0 0.0
  %854 = vmatpush.msra.mxu0 0.0
  %855 = vmatpush.msra.mxu0 0.0
  %856 = vmatpush.msra.mxu0 0.0
  %857 = vmatpush.msra.mxu0 0.0
  %858 = vmatpush.msra.mxu0 0.0
  %859 = vmatpush.msra.mxu0 %v832
  %860 = vmatpush.msra.mxu0 %v831
  %861 = vmatmul.f32.gmra.mxu0 %v834
  %v862 = vpop.f32.mrf.mxu0
  %v863 = vadd.f32 0.0, %v862
  %864 = vmatmul.f32.gmra.mxu0 %v837
  %v865 = vpop.f32.mrf.mxu0
  %v866 = vadd.f32 0.0, %v865
  %867 = vmatmul.f32.gmra.mxu0 %v840
  %v868 = vpop.f32.mrf.mxu0
  %v869 = vadd.f32 0.0, %v868
  %870 = vmatmul.f32.gmra.mxu0 %v843
  %v871 = vpop.f32.mrf.mxu0
  %v872 = vadd.f32 0.0, %v871
  %873 = vdwg.mxu0
  %v874 = vadd.f32 %v820, %v863
  %v875 = vadd.f32 %v823, %v866
  %v876 = vadd.f32 %v826, %v869
  %v877 = vadd.f32 %v829, %v872
  %v878 = vld [vmem:[%s12] sm:$0x1]
  %v880 = vperm.slane %v878, 0
  %v882 = vadd.f32 %v874, %v880
  %v883 = vadd.f32 %v875, %v880
  %v884 = vadd.f32 %v876, %v880
  %v885 = vadd.f32 %v877, %v880
  %v886 = vmax.f32 %v882, 0.0
  %v887 = vmax.f32 %v883, 0.0
  %v888 = vmax.f32 %v884, 0.0
  %v889 = vmax.f32 %v885, 0.0
  %890 = vst.msk [vmem:[%s13] sm:$0xff] %vm48, %v886
  %891 = vst.msk [vmem:[%s13 + $0x8] sm:$0xff] %vm48, %v887
  %892 = vst.msk [vmem:[%s13 + $0x10] sm:$0xff] %vm48, %v888
  %893 = vst.msk [vmem:[%s13 + $0x18] sm:$0xff] %vm48, %v889
  // Predicated region
  $region54: #{tpu_custom_call.1} parent=0 // pred_check
    _
  $region55: #{tpu_custom_call.1} parent=0 // pred_check_branch
    %895 = sbr.rel (0) target = $region57
  $region56: #{tpu_custom_call.1} parent=0 // pred_region
    _
  $region57: #{tpu_custom_call.1} parent=0 // pred_fallthru
    _
  // Predicated region
  $region58: #{tpu_custom_call.1} parent=0 // pred_check
    _
  $region59: #{tpu_custom_call.1} parent=0 // pred_check_branch
    %897 = sbr.rel (0) target = $region61
  $region60: #{tpu_custom_call.1} parent=0 // pred_region
    _
  $region61: #{tpu_custom_call.1} parent=0 // pred_fallthru
    _

</llo_original>
